<compile_context>
chip_gen: v7x
topology: tpu7x:2x2x1
jax: 0.10.0
libtpu: 0.0.40
codegen_flags: <defaults>
</compile_context>

<pallas_src>
import jax
import jax.numpy as jnp
from jax import lax
from jax.experimental import pallas as pl
from jax.experimental.pallas import tpu as pltpu


# ----------------------------- Pallas kernel --------------------------------

def conv_projection_kernel(x_ref, w_ref, b_ref, o_ref):
    # x_ref: (1, Cin, ts)   activation tile (channels on sublanes, spatial on lanes)
    # w_ref: (Cout, Cin)    VMEM-resident weight
    # b_ref: (Cout, 1)      VMEM-resident bias (lane-broadcast in the epilogue)
    # o_ref: (1, Cout, ts)  lane-dense output tile
    acc = jnp.dot(w_ref[...], x_ref[0], preferred_element_type=jnp.float32)
    o_ref[0] = (acc + b_ref[...].astype(jnp.float32)).astype(o_ref.dtype)


# ----------------------------- tile selection --------------------------------

def _pick_spatial_tile(s, n_batch, max_tile=2048, min_tile=512):
    """Largest multiple-of-128 spatial tile that divides s exactly.

    Returns None when s is not a multiple of 128 (ragged fallback).  Backs off
    toward `min_tile` only if needed to keep >= 2 parallel grid steps (v7x has
    two TensorCores); never trades below a 512-lane (HBM-efficient) tile.
    """
    if s % 128 != 0 or s == 0:
        return None
    divisors = [t for t in range(128, min(s, max_tile) + 1, 128) if s % t == 0]
    best = divisors[-1]
    for t in reversed(divisors):
        if t < min_tile:
            break
        if n_batch * (s // t) >= 2:
            return t
    return best


# ------------------------------- JAX glue ------------------------------------

def conv_projection_forward(x_ncdhw, weight, bias, stride, *, max_tile=2048):
    """ConvProjection.forward: nn.Conv3d(Cin, Cout, kernel_size=1, stride)(x)."""
    n, cin, d, h, w = x_ncdhw.shape
    cout = weight.shape[0]

    # kernel_size=1 + stride == static spatial subsampling (matches PyTorch's
    # floor((D-1)/s)+1 output extent).  With allow_input_fusion below, XLA may
    # fuse this producer into the kernel's input DMA instead of writing the
    # subsampled copy back to HBM.
    xs = x_ncdhw if stride == 1 else x_ncdhw[:, :, ::stride, ::stride, ::stride]
    do_, ho_, wo_ = xs.shape[2:5]
    s = do_ * ho_ * wo_
    x3 = xs.reshape(n, cin, s)                 # free: contiguous trailing-dim merge

    w2d = weight.reshape(cout, cin)            # (Cout, Cin)
    b2d = bias.reshape(cout, 1)                # broadcast along lanes in-kernel

    ts = _pick_spatial_tile(s, n, max_tile=max_tile)
    if ts is None:
        # Ragged spatial extent: pad once and trim once (rare; typical
        # stride-divisible shapes take the no-pad / no-trim path above).
        ts = min(max_tile, 128 * pl.cdiv(s, 128))
        s_pad = ts * pl.cdiv(s, ts)
        x3 = jnp.pad(x3, ((0, 0), (0, 0), (0, s_pad - s)))
        trim = True
    else:
        s_pad = s
        trim = False

    # VMEM budget: 2-deep pipelined in/out tiles + resident weight/bias,
    # floored at 16 MiB (v5e default scoped limit), capped at 48 MiB
    # (headroom under v7x's 64 MiB physical VMEM).
    in_bytes = x3.dtype.itemsize
    per_step = 2 * ts * (cin * in_bytes + cout * in_bytes)
    resident = 2 * (int(w2d.size) * w2d.dtype.itemsize
                    + int(b2d.size) * b2d.dtype.itemsize)
    vmem_limit = int(min(max(2 * (per_step + resident) + (2 << 20), 16 << 20),
                         48 << 20))

    grid = (n, s_pad // ts)
    out3 = pl.pallas_call(
        conv_projection_kernel,
        out_shape=jax.ShapeDtypeStruct((n, cout, s_pad), x3.dtype),
        grid_spec=pltpu.PrefetchScalarGridSpec(
            num_scalar_prefetch=0,
            grid=grid,
            in_specs=[
                pl.BlockSpec((1, cin, ts), lambda i, j: (i, 0, j)),
                pl.BlockSpec((cout, cin), lambda i, j: (0, 0)),   # resident
                pl.BlockSpec((cout, 1), lambda i, j: (0, 0)),     # resident
            ],
            out_specs=pl.BlockSpec((1, cout, ts), lambda i, j: (i, 0, j)),
        ),
        compiler_params=pltpu.CompilerParams(
            dimension_semantics=("parallel", "parallel"),
            vmem_limit_bytes=vmem_limit,
            # Allow XLA to fuse the strided-subsample/reshape producer of x3
            # into the kernel's input pipeline (no intermediate HBM copy).
            allow_input_fusion=[True, False, False],
        ),
    )(x3, w2d, b2d)

    if trim:
        out3 = out3[:, :, :s]                  # padded lanes hold bias; drop them
    return out3.reshape(n, cout, do_, ho_, wo_)   # free: already NCDHW order


# -------------------------- pure-JAX reference -------------------------------

def reference_forward(x_ncdhw, weight, bias, stride):
    y = lax.conv_general_dilated(
        x_ncdhw, weight,
        window_strides=(stride, stride, stride),
        padding="VALID",
        dimension_numbers=("NCDHW", "OIDHW", "NCDHW"))
    return y + bias.reshape(1, -1, 1, 1, 1)


# ----------------------------------- main ------------------------------------

if __name__ == "__main__":
    # Typical ResNet-style projection: Cin=64 -> Cout=128, stride=2.
    N, CIN, COUT, D, H, W, STRIDE = 2, 64, 128, 16, 16, 16, 2

    key = jax.random.PRNGKey(0)
    kx, kw, kb = jax.random.split(key, 3)
    x = jax.random.normal(kx, (N, CIN, D, H, W), jnp.float32)
    # PyTorch Conv3d weight layout: (Cout, Cin, kD, kH, kW) with k=1.
    weight = 0.05 * jax.random.normal(kw, (COUT, CIN, 1, 1, 1), jnp.float32)
    bias = 0.1 * jax.random.normal(kb, (COUT,), jnp.float32)

    @jax.jit
    def fwd(xx, ww, bb):
        return conv_projection_forward(xx, ww, bb, STRIDE)

    out = jax.block_until_ready(fwd(x, weight, bias))
    assert out.shape == (N, COUT, D // STRIDE, H // STRIDE, W // STRIDE)

    ref = reference_forward(x, weight, bias, STRIDE)
    max_err = float(jnp.max(jnp.abs(out - ref)))
    if not bool(jnp.allclose(out, ref, atol=1e-3, rtol=1e-3)):
        raise AssertionError(f"Pallas/ref mismatch (f32), max abs err = {max_err}")

    # Optional bf16-I/O path (halves HBM bytes; f32 accumulation in-kernel).
    out_bf16 = jax.block_until_ready(
        fwd(x.astype(jnp.bfloat16),
            weight.astype(jnp.bfloat16),
            bias.astype(jnp.bfloat16)))
    max_err_bf16 = float(jnp.max(jnp.abs(out_bf16.astype(jnp.float32) - ref)))
    if not bool(jnp.allclose(out_bf16.astype(jnp.float32), ref,
                             atol=5e-2, rtol=5e-2)):
        raise AssertionError(
            f"Pallas/ref mismatch (bf16 I/O), max abs err = {max_err_bf16}")

    print("KERNEL_OK")
</pallas_src>

<mosaic_0001>
module attributes {stable_mosaic.version = 11 : i64} {
  func.func @conv_projection_kernel(%arg0: i32, %arg1: i32, %arg2: memref<1x64x512xf32, #tpu.memory_space<vmem>>, %arg3: memref<128x64xf32, #tpu.memory_space<vmem>>, %arg4: memref<128x1xf32, #tpu.memory_space<vmem>>, %arg5: memref<1x128x512xf32, #tpu.memory_space<vmem>>) attributes {dimension_semantics = [#tpu.dimension_semantics<parallel>, #tpu.dimension_semantics<parallel>], iteration_bounds = array<i64: 2, 1>, scalar_prefetch = 0 : i64, scratch_operands = 0 : i64, tpu.core_type = #tpu.core_type<tc>, window_params = [{transform_indices = @transform_0, window_bounds = array<i64: 1, 64, 512>}, {pipeline_mode = #tpu.pipeline_mode<synchronous>, transform_indices = @transform_1, window_bounds = array<i64: 128, 64>}, {pipeline_mode = #tpu.pipeline_mode<synchronous>, transform_indices = @transform_2, window_bounds = array<i64: 128, 1>}, {transform_indices = @transform_3, window_bounds = array<i64: 1, 128, 512>}]} {
    %c0 = arith.constant 0 : index
    %c0_0 = arith.constant 0 : index
    %0 = vector.load %arg3[%c0, %c0_0] : memref<128x64xf32, #tpu.memory_space<vmem>>, vector<128x64xf32>
    %c0_1 = arith.constant 0 : index
    %c0_2 = arith.constant 0 : index
    %c0_3 = arith.constant 0 : index
    %1 = vector.load %arg2[%c0_1, %c0_2, %c0_3] : memref<1x64x512xf32, #tpu.memory_space<vmem>>, vector<1x64x512xf32>
    %2 = vector.shape_cast %1 : vector<1x64x512xf32> to vector<64x512xf32>
    %cst = arith.constant dense<0.000000e+00> : vector<128x512xf32>
    %3 = tpu.matmul %0, %2, %cst {dimension_numbers = #tpu.dot_dimension_numbers<[1], [0], [0], [1], [0, 0, 1, 1], [], []>} : vector<128x64xf32>, vector<64x512xf32>, vector<128x512xf32> -> vector<128x512xf32>
    %c0_4 = arith.constant 0 : index
    %c0_5 = arith.constant 0 : index
    %4 = vector.load %arg4[%c0_4, %c0_5] : memref<128x1xf32, #tpu.memory_space<vmem>>, vector<128x1xf32>
    %5 = vector.broadcast %4 : vector<128x1xf32> to vector<128x512xf32>
    %6 = arith.addf %3, %5 : vector<128x512xf32>
    %c0_6 = arith.constant 0 : index
    %c0_7 = arith.constant 0 : index
    %c0_8 = arith.constant 0 : index
    %7 = vector.load %arg5[%c0_6, %c0_7, %c0_8] : memref<1x128x512xf32, #tpu.memory_space<vmem>>, vector<1x128x512xf32>
    %8 = vector.shape_cast %7 : vector<1x128x512xf32> to vector<128x512xf32>
    %9 = vector.shape_cast %6 : vector<128x512xf32> to vector<1x128x512xf32>
    tpu.vector_store %arg5[%c0_6, %c0_7, %c0_8], %9 {strides = array<i32>} : memref<1x128x512xf32, #tpu.memory_space<vmem>>, vector<1x128x512xf32>,
    return
  }
  func.func @transform_0(%arg0: i32, %arg1: i32) -> (i32, i32, i32) {
    %c0_i32 = arith.constant 0 : i32
    %c0_i32_0 = arith.constant 0 : i32
    return %arg0, %c0_i32, %arg1 : i32, i32, i32
  }
  func.func @transform_1(%arg0: i32, %arg1: i32) -> (i32, i32) {
    %c0_i32 = arith.constant 0 : i32
    %c0_i32_0 = arith.constant 0 : i32
    %c0_i32_1 = arith.constant 0 : i32
    return %c0_i32, %c0_i32_0 : i32, i32
  }
  func.func @transform_2(%arg0: i32, %arg1: i32) -> (i32, i32) {
    %c0_i32 = arith.constant 0 : i32
    %c0_i32_0 = arith.constant 0 : i32
    %c0_i32_1 = arith.constant 0 : i32
    return %c0_i32, %c0_i32_0 : i32, i32
  }
  func.func @transform_3(%arg0: i32, %arg1: i32) -> (i32, i32, i32) {
    %c0_i32 = arith.constant 0 : i32
    %c0_i32_0 = arith.constant 0 : i32
    return %arg0, %c0_i32, %arg1 : i32, i32, i32
  }
}

</mosaic_0001>

<llo_original>
// kernel: fwd.1
$region0: #{fwd.1}
  #allocation0 [shape = 'u32[]', space=smem, size = 0x4, offset = 0x4, fixed_abs, tag = 'smem constant byte address 0x4 - core index']
  #allocation1 [shape = 'u32[144,128]{1,0:T(1,128)}', space=vmem, size = 0x12000, scoped, tag = 'internal scratch']
  %s0 = inlined_call_operand.vmem [shape: f32[2,64,512], index: 0, kind: input, shape index: {}]
  %s1 = inlined_call_operand.vmem [shape: f32[128,64], index: 1, kind: input, shape index: {}]
  %s2 = inlined_call_operand.vmem [shape: f32[128,1], index: 2, kind: input, shape index: {}]
  %s3 = inlined_call_operand.vmem [shape: f32[2,128,512], index: 3, kind: output, shape index: {}]
  %s4 = sld [smem:[#allocation0]]
  $region45: #{fwd.1} parent=0
    _
  %s6 = ssub.s32 1, %s4
  %s7 = scalar_select 0, %s6, %s4
  loop: start=0, step=1, limit=4
  $region2: #{fwd.1} parent=0 // loop_pre_header
    _
  $region3: #{fwd.1} parent=0 // loop_header
    %s9 = sphi 0, %s13
    %p10 = scmp.ge.s32.totalorder %s9, 4
    %s16 = sphi 0, %s28
    %s17 = sphi 0, %s24
    %s18 = sphi 0, %s16
    %s19 = sphi 0, %s17
    %s20 = sphi 0, %s18
    %s21 = sphi 0, %s19
    %s33 = sphi 0, %s35
    %s36 = sphi 0, %s33
    %s37 = sphi 0, %s36
    %s53 = sphi 0, %s37
    %s57 = sphi 0, %s57
    %s59 = sphi 0, %s57
    %s60 = sphi 0, %s59
    %s74 = sphi 0, %s60
    %s78 = sphi 0, %s78
    %s80 = sphi 0, %s78
    %s81 = sphi 0, %s80
    %s95 = sphi 0, %s81
    %s103 = sphi 0, %s105
    %s106 = sphi 0, %s103
    %s107 = sphi 0, %s106
    %s123 = sphi 0, %s107
  $region4: #{fwd.1} parent=0 // loop_header_branch
    %12 = sbr.rel (%p10) target = $region8
  $region5: #{fwd.1} parent=0 // loop_body
    %s14 = ssub.s32 %s9, 1
    %s15 = ssub.s32 %s9, 2
    %s22 = sadd.s32 1, %s17
    %p23 = scmp.ge.s32.totalorder %s22, 1
    %s24 = scalar_select %p23, 0, %s22
    %s25 = sadd.s32 1, %s16
    %s26 = scalar_select %p23, %s25, %s16
    %p27 = scmp.ge.s32.totalorder %s26, 2
    %s28 = scalar_select %p27, 0, %s26
    %s29 = ssub.s32 %s16, %s28
    %s30 = ssub.s32 %s17, %s24
    %s31 = sor.u32 %s29, %s30
    %p32 = scmp.eq.s32.totalorder %s31, 0
    %s34 = sadd.s32 %s33, 1
    %s35 = scalar_select %p32, %s33, %s34
    %p38 = pneg %p32
    %p39 = scmp.eq.s32.totalorder %s9, 1
    %p40 = por %p38, %p39
    %p41 = scmp.ne.s32.totalorder %s33, %s36
    %p42 = scmp.eq.s32.totalorder %s9, 0
    %p43 = por %p41, %p42
    %p44 = scmp.ne.s32.totalorder %s33, %s36
    %p45 = scmp.eq.s32.totalorder %s14, 1
    %p46 = por %p44, %p45
    %p47 = scmp.ne.s32.totalorder %s36, %s37
    %p48 = scmp.eq.s32.totalorder %s14, 0
    %p49 = por %p47, %p48
    %p50 = scmp.ne.s32.totalorder %s36, %s37
    %p51 = scmp.eq.s32.totalorder %s15, 1
    %p52 = por %p50, %p51
    %p54 = scmp.ne.s32.totalorder %s37, %s53
    %p55 = scmp.eq.s32.totalorder %s15, 0
    %p56 = por %p54, %p55
    %s58 = sadd.s32 %s57, 1
    %p61 = scmp.eq.s32.totalorder %s9, 1
    %p62 = scmp.ne.s32.totalorder %s57, %s59
    %p63 = scmp.eq.s32.totalorder %s9, 0
    %p64 = por %p62, %p63
    %p65 = scmp.ne.s32.totalorder %s57, %s59
    %p66 = scmp.eq.s32.totalorder %s14, 1
    %p67 = por %p65, %p66
    %p68 = scmp.ne.s32.totalorder %s59, %s60
    %p69 = scmp.eq.s32.totalorder %s14, 0
    %p70 = por %p68, %p69
    %p71 = scmp.ne.s32.totalorder %s59, %s60
    %p72 = scmp.eq.s32.totalorder %s15, 1
    %p73 = por %p71, %p72
    %p75 = scmp.ne.s32.totalorder %s60, %s74
    %p76 = scmp.eq.s32.totalorder %s15, 0
    %p77 = por %p75, %p76
    %s79 = sadd.s32 %s78, 1
    %p82 = scmp.eq.s32.totalorder %s9, 1
    %p83 = scmp.ne.s32.totalorder %s78, %s80
    %p84 = scmp.eq.s32.totalorder %s9, 0
    %p85 = por %p83, %p84
    %p86 = scmp.ne.s32.totalorder %s78, %s80
    %p87 = scmp.eq.s32.totalorder %s14, 1
    %p88 = por %p86, %p87
    %p89 = scmp.ne.s32.totalorder %s80, %s81
    %p90 = scmp.eq.s32.totalorder %s14, 0
    %p91 = por %p89, %p90
    %p92 = scmp.ne.s32.totalorder %s80, %s81
    %p93 = scmp.eq.s32.totalorder %s15, 1
    %p94 = por %p92, %p93
    %p96 = scmp.ne.s32.totalorder %s81, %s95
    %p97 = scmp.eq.s32.totalorder %s15, 0
    %p98 = por %p96, %p97
    %s99 = ssub.s32 %s16, %s28
    %s100 = ssub.s32 %s17, %s24
    %s101 = sor.u32 %s99, %s100
    %p102 = scmp.eq.s32.totalorder %s101, 0
    %s104 = sadd.s32 %s103, 1
    %s105 = scalar_select %p102, %s103, %s104
    %p108 = pneg %p102
    %p109 = scmp.eq.s32.totalorder %s9, 1
    %p110 = por %p108, %p109
    %p111 = scmp.ne.s32.totalorder %s103, %s106
    %p112 = scmp.eq.s32.totalorder %s9, 0
    %p113 = por %p111, %p112
    %p114 = scmp.ne.s32.totalorder %s103, %s106
    %p115 = scmp.eq.s32.totalorder %s14, 1
    %p116 = por %p114, %p115
    %p117 = scmp.ne.s32.totalorder %s106, %s107
    %p118 = scmp.eq.s32.totalorder %s14, 0
    %p119 = por %p117, %p118
    %p120 = scmp.ne.s32.totalorder %s106, %s107
    %p121 = scmp.eq.s32.totalorder %s15, 1
    %p122 = por %p120, %p121
    %p124 = scmp.ne.s32.totalorder %s107, %s123
    %p125 = scmp.eq.s32.totalorder %s15, 0
    %p126 = por %p124, %p125
    %p127 = scmp.le.s32.totalorder 1, %s9
    %p128 = scmp.lt.s32.totalorder %s9, 3
    %p129 = pnand %p127, %p128
    %p130 = pneg %p129
    // Predicated region
    $region9: #{fwd.1} parent=5 // pred_check
      _
    $region10: #{fwd.1} parent=5 // pred_check_branch
      %132 = sbr.rel (%p129) target = $region12
    $region11: #{fwd.1} parent=5 // pred_region
      %s133 = ssub.s32 %s9, 1
      // Predicated region
      $region13: #{fwd.1} parent=11 // pred_check
        %p134 = pneg %p70
      $region14: #{fwd.1} parent=11 // pred_check_branch
        %136 = sbr.rel (%p134) target = $region16
      $region15: #{fwd.1} parent=11 // pred_region
        _
      $region16: #{fwd.1} parent=11 // pred_fallthru
        _
      // Predicated region
      $region17: #{fwd.1} parent=11 // pred_check
        %p137 = pneg %p91
      $region18: #{fwd.1} parent=11 // pred_check_branch
        %139 = sbr.rel (%p137) target = $region20
      $region19: #{fwd.1} parent=11 // pred_region
        _
      $region20: #{fwd.1} parent=11 // pred_fallthru
        _
    $region12: #{fwd.1} parent=5 // pred_fallthru
      _
    %p140 = scmp.lt.s32.totalorder %s9, 2
    // Predicated region
    $region21: #{fwd.1} parent=5 // pred_check
      %p141 = pneg %p140
    $region22: #{fwd.1} parent=5 // pred_check_branch
      %143 = sbr.rel (%p141) target = $region24
    $region23: #{fwd.1} parent=5 // pred_region
      // Predicated region
      $region25: #{fwd.1} parent=23 // pred_check
        %p144 = pneg %p43
      $region26: #{fwd.1} parent=23 // pred_check_branch
        %146 = sbr.rel (%p144) target = $region28
      $region27: #{fwd.1} parent=23 // pred_region
        %s147 = smul.u32 4, %s17
        %p148 = scmp.lt.s32.totalorder %s16, 1
        %s149 = scalar_select %p148, %s16, 1
        %p150 = scmp.lt.s32.totalorder %s147, 3
        %s151 = scalar_select %p150, %s147, 3
        %s152 = smul.addr %s149, 32
        %s153 = sadd.s32 %s151, %s152
        %s154 = smul.addr %s153, 8
        %s155 = scalar_lea.vmem %s0, %s154
        %s156 = smul.u32 4, %s17
      $region28: #{fwd.1} parent=23 // pred_fallthru
        _
    $region24: #{fwd.1} parent=5 // pred_fallthru
      _
    %p157 = scmp.le.s32.totalorder 1, %s9
    %p158 = scmp.lt.s32.totalorder %s9, 3
    %p159 = pnand %p157, %p158
    %p160 = pneg %p159
    // Predicated region
    $region29: #{fwd.1} parent=5 // pred_check
      _
    $region30: #{fwd.1} parent=5 // pred_check_branch
      %162 = sbr.rel (%p159) target = $region32
    $region31: #{fwd.1} parent=5 // pred_region
      %s163 = ssub.s32 %s9, 1
      %s164 = smul.u32 4, %s19
      %p165 = scmp.lt.s32.totalorder %s18, 1
      %s166 = scalar_select %p165, %s18, 1
      %p167 = scmp.lt.s32.totalorder %s164, 3
      %s168 = scalar_select %p167, %s164, 3
      %s169 = smul.addr %s166, 32
      %s170 = sadd.s32 %s168, %s169
      %s171 = smul.addr %s170, 8
      %s172 = scalar_lea.vmem %s0, %s171
      %p173 = pneg %p49
      %p174 = pneg %p46
      %p175 = pneg %p70
      %p176 = pneg %p67
      %p177 = pneg %p91
      %p178 = pneg %p88
      %p179 = pneg %p119
      %p180 = pneg %p116
      %s181 = smul.u32 4, %s19
      %p182 = scmp.lt.s32.totalorder %s18, 1
      %s183 = scalar_select %p182, %s18, 1
      %p184 = scmp.lt.s32.totalorder %s181, 3
      %s185 = scalar_select %p184, %s181, 3
      %s186 = smul.addr %s183, 64
      %s187 = sadd.s32 %s185, %s186
      %s188 = smul.addr %s187, 8
      %s189 = scalar_lea.vmem %s3, %s188
      %s190 = smul.u32 4, %s19
      %p191 = scmp.lt.s32.totalorder %s18, 1
      %s192 = scalar_select %p191, %s18, 1
      %p193 = scmp.lt.s32.totalorder %s190, 3
      %s194 = scalar_select %p193, %s190, 3
      %s195 = smul.addr %s192, 32
      %s196 = sadd.s32 %s194, %s195
      %s197 = smul.addr %s196, 8
      %s198 = scalar_lea.vmem %s0, %s197
      %s199 = smul.u32 4, %s19
      %s200 = smul.u32 4, %s19
      %p201 = scmp.lt.s32.totalorder %s18, 1
      %s202 = scalar_select %p201, %s18, 1
      %p203 = scmp.lt.s32.totalorder %s200, 3
      %s204 = scalar_select %p203, %s200, 3
      %s205 = smul.addr %s202, 64
      %s206 = sadd.s32 %s204, %s205
      %s207 = smul.addr %s206, 8
      %s208 = scalar_lea.vmem %s3, %s207
      %s209 = smul.u32 4, %s19
      %v210 = vld [vmem:[%s1] sm:$0xff]
      %v211 = vld [vmem:[%s1 + $0x8] sm:$0xff]
      %v212 = vld [vmem:[%s1 + $0x10] sm:$0xff]
      %v213 = vld [vmem:[%s1 + $0x18] sm:$0xff]
      %v214 = vld [vmem:[%s1 + $0x20] sm:$0xff]
      %v215 = vld [vmem:[%s1 + $0x28] sm:$0xff]
      %v216 = vld [vmem:[%s1 + $0x30] sm:$0xff]
      %v217 = vld [vmem:[%s1 + $0x38] sm:$0xff]
      %v218 = vld [vmem:[%s1 + $0x40] sm:$0xff]
      %v219 = vld [vmem:[%s1 + $0x48] sm:$0xff]
      %v220 = vld [vmem:[%s1 + $0x50] sm:$0xff]
      %v221 = vld [vmem:[%s1 + $0x58] sm:$0xff]
      %v222 = vld [vmem:[%s1 + $0x60] sm:$0xff]
      %v223 = vld [vmem:[%s1 + $0x68] sm:$0xff]
      %v224 = vld [vmem:[%s1 + $0x70] sm:$0xff]
      %v225 = vld [vmem:[%s1 + $0x78] sm:$0xff]
      %v226 = vld [vmem:[%s198] sm:$0xff]
      %v227 = vld [vmem:[%s198 + $0x8] sm:$0xff]
      %v228 = vld [vmem:[%s198 + $0x10] sm:$0xff]
      %v229 = vld [vmem:[%s198 + $0x18] sm:$0xff]
      %v230 = vld [vmem:[%s198 + $0x20] sm:$0xff]
      %v231 = vld [vmem:[%s198 + $0x28] sm:$0xff]
      %v232 = vld [vmem:[%s198 + $0x30] sm:$0xff]
      %v233 = vld [vmem:[%s198 + $0x38] sm:$0xff]
      %v234 = vld [vmem:[%s198 + $0x40] sm:$0xff]
      %v235 = vld [vmem:[%s198 + $0x48] sm:$0xff]
      %v236 = vld [vmem:[%s198 + $0x50] sm:$0xff]
      %v237 = vld [vmem:[%s198 + $0x58] sm:$0xff]
      %v238 = vld [vmem:[%s198 + $0x60] sm:$0xff]
      %v239 = vld [vmem:[%s198 + $0x68] sm:$0xff]
      %v240 = vld [vmem:[%s198 + $0x70] sm:$0xff]
      %v241 = vld [vmem:[%s198 + $0x78] sm:$0xff]
      %v242 = vld [vmem:[%s198 + $0x80] sm:$0xff]
      %v243 = vld [vmem:[%s198 + $0x88] sm:$0xff]
      %v244 = vld [vmem:[%s198 + $0x90] sm:$0xff]
      %v245 = vld [vmem:[%s198 + $0x98] sm:$0xff]
      %v246 = vld [vmem:[%s198 + $0xa0] sm:$0xff]
      %v247 = vld [vmem:[%s198 + $0xa8] sm:$0xff]
      %v248 = vld [vmem:[%s198 + $0xb0] sm:$0xff]
      %v249 = vld [vmem:[%s198 + $0xb8] sm:$0xff]
      %v250 = vld [vmem:[%s198 + $0xc0] sm:$0xff]
      %v251 = vld [vmem:[%s198 + $0xc8] sm:$0xff]
      %v252 = vld [vmem:[%s198 + $0xd0] sm:$0xff]
      %v253 = vld [vmem:[%s198 + $0xd8] sm:$0xff]
      %v254 = vld [vmem:[%s198 + $0xe0] sm:$0xff]
      %v255 = vld [vmem:[%s198 + $0xe8] sm:$0xff]
      %v256 = vld [vmem:[%s198 + $0xf0] sm:$0xff]
      %v257 = vld [vmem:[%s198 + $0xf8] sm:$0xff]
      %v258 = vld [vmem:[%s2] sm:$0xff]
      %v259 = vld [vmem:[%s2 + $0x8] sm:$0xff]
      %v260 = vld [vmem:[%s2 + $0x10] sm:$0xff]
      %v261 = vld [vmem:[%s2 + $0x18] sm:$0xff]
      %v262 = vld [vmem:[%s2 + $0x20] sm:$0xff]
      %v263 = vld [vmem:[%s2 + $0x28] sm:$0xff]
      %v264 = vld [vmem:[%s2 + $0x30] sm:$0xff]
      %v265 = vld [vmem:[%s2 + $0x38] sm:$0xff]
      %v266 = vld [vmem:[%s2 + $0x40] sm:$0xff]
      %v267 = vld [vmem:[%s2 + $0x48] sm:$0xff]
      %v268 = vld [vmem:[%s2 + $0x50] sm:$0xff]
      %v269 = vld [vmem:[%s2 + $0x58] sm:$0xff]
      %v270 = vld [vmem:[%s2 + $0x60] sm:$0xff]
      %v271 = vld [vmem:[%s2 + $0x68] sm:$0xff]
      %v272 = vld [vmem:[%s2 + $0x70] sm:$0xff]
      %v273 = vld [vmem:[%s2 + $0x78] sm:$0xff]
      %275 = vset.pattern.permute.xlu0 0
      %276 = vperm.xlu0 %275, %v258
      %v277 = vpop.permute.xlu0 %276
      %280 = vset.pattern.permute.xlu0 0
      %281 = vperm.xlu0 %280, %v259
      %v282 = vpop.permute.xlu0 %281
      %285 = vset.pattern.permute.xlu0 0
      %286 = vperm.xlu0 %285, %v260
      %v287 = vpop.permute.xlu0 %286
      %290 = vset.pattern.permute.xlu0 0
      %291 = vperm.xlu0 %290, %v261
      %v292 = vpop.permute.xlu0 %291
      %295 = vset.pattern.permute.xlu0 0
      %296 = vperm.xlu0 %295, %v262
      %v297 = vpop.permute.xlu0 %296
      %300 = vset.pattern.permute.xlu0 0
      %301 = vperm.xlu0 %300, %v263
      %v302 = vpop.permute.xlu0 %301
      %305 = vset.pattern.permute.xlu0 0
      %306 = vperm.xlu0 %305, %v264
      %v307 = vpop.permute.xlu0 %306
      %310 = vset.pattern.permute.xlu0 0
      %311 = vperm.xlu0 %310, %v265
      %v312 = vpop.permute.xlu0 %311
      %315 = vset.pattern.permute.xlu0 0
      %316 = vperm.xlu0 %315, %v266
      %v317 = vpop.permute.xlu0 %316
      %320 = vset.pattern.permute.xlu0 0
      %321 = vperm.xlu0 %320, %v267
      %v322 = vpop.permute.xlu0 %321
      %325 = vset.pattern.permute.xlu0 0
      %326 = vperm.xlu0 %325, %v268
      %v327 = vpop.permute.xlu0 %326
      %330 = vset.pattern.permute.xlu0 0
      %331 = vperm.xlu0 %330, %v269
      %v332 = vpop.permute.xlu0 %331
      %335 = vset.pattern.permute.xlu0 0
      %336 = vperm.xlu0 %335, %v270
      %v337 = vpop.permute.xlu0 %336
      %340 = vset.pattern.permute.xlu0 0
      %341 = vperm.xlu0 %340, %v271
      %v342 = vpop.permute.xlu0 %341
      %345 = vset.pattern.permute.xlu0 0
      %346 = vperm.xlu0 %345, %v272
      %v347 = vpop.permute.xlu0 %346
      %350 = vset.pattern.permute.xlu0 0
      %351 = vperm.xlu0 %350, %v273
      %v352 = vpop.permute.xlu0 %351
      %vm354 = vcmask 523264
      %v356 = vsel %vm354, %v210, 0
      %v359 = vsel %vm354, %v211, 0
      %v362 = vsel %vm354, %v212, 0
      %v365 = vsel %vm354, %v213, 0
      %v368 = vsel %vm354, %v214, 0
      %v371 = vsel %vm354, %v215, 0
      %v374 = vsel %vm354, %v216, 0
      %v377 = vsel %vm354, %v217, 0
      %v380 = vsel %vm354, %v218, 0
      %v383 = vsel %vm354, %v219, 0
      %v386 = vsel %vm354, %v220, 0
      %v389 = vsel %vm354, %v221, 0
      %v392 = vsel %vm354, %v222, 0
      %v395 = vsel %vm354, %v223, 0
      %v398 = vsel %vm354, %v224, 0
      %v401 = vsel %vm354, %v225, 0
      %403 = vmatprep.subr.mxu0 %v227
      %404 = vmatpush1.msra.mxu0 %v226
      %405 = vmatprep.subr.mxu0 %v231
      %406 = vmatpush1.msra.mxu0 %v230
      %407 = vmatprep.subr.mxu0 %v235
      %408 = vmatpush1.msra.mxu0 %v234
      %409 = vmatprep.subr.mxu0 %v239
      %410 = vmatpush1.msra.mxu0 %v238
      %411 = vmatprep.subr.mxu0 %v243
      %412 = vmatpush1.msra.mxu0 %v242
      %413 = vmatprep.subr.mxu0 %v247
      %414 = vmatpush1.msra.mxu0 %v246
      %415 = vmatprep.subr.mxu0 %v251
      %416 = vmatpush1.msra.mxu0 %v250
      %417 = vmatprep.subr.mxu0 %v255
      %418 = vmatpush1.msra.mxu0 %v254
      %419 = vmatprep.subr.mxu0 0.0
      %420 = vmatpush1.msra.mxu0 0.0
      %421 = vmatprep.subr.mxu0 0.0
      %422 = vmatpush1.msra.mxu0 0.0
      %423 = vmatprep.subr.mxu0 0.0
      %424 = vmatpush1.msra.mxu0 0.0
      %425 = vmatprep.subr.mxu0 0.0
      %426 = vmatpush1.msra.mxu0 0.0
      %427 = vmatprep.subr.mxu0 0.0
      %428 = vmatpush1.msra.mxu0 0.0
      %429 = vmatprep.subr.mxu0 0.0
      %430 = vmatpush1.msra.mxu0 0.0
      %431 = vmatprep.subr.mxu0 0.0
      %432 = vmatpush1.msra.mxu0 0.0
      %433 = vmatprep.subr.mxu0 0.0
      %434 = vmatpush1.msra.mxu0 0.0
      %435 = vmatprep.subr.mxu0 0.0
      %436 = vmatpush1.msra.mxu0 0.0
      %437 = vmatprep.subr.mxu0 0.0
      %438 = vmatpush1.msra.mxu0 0.0
      %439 = vmatprep.subr.mxu0 0.0
      %440 = vmatpush1.msra.mxu0 0.0
      %441 = vmatprep.subr.mxu0 0.0
      %442 = vmatpush1.msra.mxu0 0.0
      %443 = vmatprep.subr.mxu0 0.0
      %444 = vmatpush1.msra.mxu0 0.0
      %445 = vmatprep.subr.mxu0 0.0
      %446 = vmatpush1.msra.mxu0 0.0
      %447 = vmatprep.subr.mxu0 0.0
      %448 = vmatpush1.msra.mxu0 0.0
      %449 = vmatprep.subr.mxu0 0.0
      %450 = vmatpush1.msra.mxu0 0.0
      %451 = vmatprep.subr.mxu0 0.0
      %452 = vmatpush1.msra.mxu0 0.0
      %453 = vmatprep.subr.mxu0 0.0
      %454 = vmatpush1.msra.mxu0 0.0
      %455 = vmatprep.subr.mxu0 0.0
      %456 = vmatpush1.msra.mxu0 0.0
      %457 = vmatprep.subr.mxu0 0.0
      %458 = vmatpush1.msra.mxu0 0.0
      %459 = vmatprep.subr.mxu0 0.0
      %460 = vmatpush1.msra.mxu0 0.0
      %461 = vmatprep.subr.mxu0 0.0
      %462 = vmatpush1.msra.mxu0 0.0
      %463 = vmatprep.subr.mxu0 0.0
      %464 = vmatpush1.msra.mxu0 0.0
      %465 = vmatprep.subr.mxu0 0.0
      %466 = vmatpush1.msra.mxu0 0.0
      %467 = vmatprep.mubr.f32.mxu0 0.0
      %468 = vmatmul.mubr.f32.gmra.mrb[0].mxu0 %v356
      %v469 = vpop.f32.mrb[0].mxu0
      %v470 = vadd.f32 %v277, %v469
      %v471 = vpop.f32.mrb[0].mxu0
      %v472 = vadd.f32 %v277, %v471
      %473 = vmatprep.mubr.f32.mxu0 0.0
      %474 = vmatmul.mubr.f32.gmra.mrb[0].mxu0 %v359
      %v475 = vpop.f32.mrb[0].mxu0
      %v476 = vadd.f32 %v282, %v475
      %v477 = vpop.f32.mrb[0].mxu0
      %v478 = vadd.f32 %v282, %v477
      %479 = vmatprep.mubr.f32.mxu0 0.0
      %480 = vmatmul.mubr.f32.gmra.mrb[0].mxu0 %v362
      %v481 = vpop.f32.mrb[0].mxu0
      %v482 = vadd.f32 %v287, %v481
      %v483 = vpop.f32.mrb[0].mxu0
      %v484 = vadd.f32 %v287, %v483
      %485 = vmatprep.mubr.f32.mxu0 0.0
      %486 = vmatmul.mubr.f32.gmra.mrb[0].mxu0 %v365
      %v487 = vpop.f32.mrb[0].mxu0
      %v488 = vadd.f32 %v292, %v487
      %v489 = vpop.f32.mrb[0].mxu0
      %v490 = vadd.f32 %v292, %v489
      %491 = vmatprep.mubr.f32.mxu0 0.0
      %492 = vmatmul.mubr.f32.gmra.mrb[0].mxu0 %v368
      %v493 = vpop.f32.mrb[0].mxu0
      %v494 = vadd.f32 %v297, %v493
      %v495 = vpop.f32.mrb[0].mxu0
      %v496 = vadd.f32 %v297, %v495
      %497 = vmatprep.mubr.f32.mxu0 0.0
      %498 = vmatmul.mubr.f32.gmra.mrb[0].mxu0 %v371
      %v499 = vpop.f32.mrb[0].mxu0
      %v500 = vadd.f32 %v302, %v499
      %v501 = vpop.f32.mrb[0].mxu0
      %v502 = vadd.f32 %v302, %v501
      %503 = vmatprep.mubr.f32.mxu0 0.0
      %504 = vmatmul.mubr.f32.gmra.mrb[0].mxu0 %v374
      %v505 = vpop.f32.mrb[0].mxu0
      %v506 = vadd.f32 %v307, %v505
      %v507 = vpop.f32.mrb[0].mxu0
      %v508 = vadd.f32 %v307, %v507
      %509 = vmatprep.mubr.f32.mxu0 0.0
      %510 = vmatmul.mubr.f32.gmra.mrb[0].mxu0 %v377
      %v511 = vpop.f32.mrb[0].mxu0
      %v512 = vadd.f32 %v312, %v511
      %v513 = vpop.f32.mrb[0].mxu0
      %v514 = vadd.f32 %v312, %v513
      %515 = vmatprep.mubr.f32.mxu0 0.0
      %516 = vmatmul.mubr.f32.gmra.mrb[0].mxu0 %v380
      %v517 = vpop.f32.mrb[0].mxu0
      %v518 = vadd.f32 %v317, %v517
      %v519 = vpop.f32.mrb[0].mxu0
      %v520 = vadd.f32 %v317, %v519
      %521 = vmatprep.mubr.f32.mxu0 0.0
      %522 = vmatmul.mubr.f32.gmra.mrb[0].mxu0 %v383
      %v523 = vpop.f32.mrb[0].mxu0
      %v524 = vadd.f32 %v322, %v523
      %v525 = vpop.f32.mrb[0].mxu0
      %v526 = vadd.f32 %v322, %v525
      %527 = vmatprep.mubr.f32.mxu0 0.0
      %528 = vmatmul.mubr.f32.gmra.mrb[0].mxu0 %v386
      %v529 = vpop.f32.mrb[0].mxu0
      %v530 = vadd.f32 %v327, %v529
      %v531 = vpop.f32.mrb[0].mxu0
      %v532 = vadd.f32 %v327, %v531
      %533 = vmatprep.mubr.f32.mxu0 0.0
      %534 = vmatmul.mubr.f32.gmra.mrb[0].mxu0 %v389
      %v535 = vpop.f32.mrb[0].mxu0
      %v536 = vadd.f32 %v332, %v535
      %v537 = vpop.f32.mrb[0].mxu0
      %v538 = vadd.f32 %v332, %v537
      %539 = vmatprep.mubr.f32.mxu0 0.0
      %540 = vmatmul.mubr.f32.gmra.mrb[0].mxu0 %v392
      %v541 = vpop.f32.mrb[0].mxu0
      %v542 = vadd.f32 %v337, %v541
      %v543 = vpop.f32.mrb[0].mxu0
      %v544 = vadd.f32 %v337, %v543
      %545 = vmatprep.mubr.f32.mxu0 0.0
      %546 = vmatmul.mubr.f32.gmra.mrb[0].mxu0 %v395
      %v547 = vpop.f32.mrb[0].mxu0
      %v548 = vadd.f32 %v342, %v547
      %v549 = vpop.f32.mrb[0].mxu0
      %v550 = vadd.f32 %v342, %v549
      %551 = vmatprep.mubr.f32.mxu0 0.0
      %552 = vmatmul.mubr.f32.gmra.mrb[0].mxu0 %v398
      %v553 = vpop.f32.mrb[0].mxu0
      %v554 = vadd.f32 %v347, %v553
      %v555 = vpop.f32.mrb[0].mxu0
      %v556 = vadd.f32 %v347, %v555
      %557 = vmatprep.mubr.f32.mxu0 0.0
      %558 = vmatmul.mubr.f32.gmra.mrb[0].mxu0 %v401
      %v559 = vpop.f32.mrb[0].mxu0
      %v560 = vadd.f32 %v352, %v559
      %v561 = vpop.f32.mrb[0].mxu0
      %v562 = vadd.f32 %v352, %v561
      %563 = vdwg.mxu0
      %564 = vmatprep.subr.mxu0 %v229
      %565 = vmatpush1.msra.mxu0 %v228
      %566 = vmatprep.subr.mxu0 %v233
      %567 = vmatpush1.msra.mxu0 %v232
      %568 = vmatprep.subr.mxu0 %v237
      %569 = vmatpush1.msra.mxu0 %v236
      %570 = vmatprep.subr.mxu0 %v241
      %571 = vmatpush1.msra.mxu0 %v240
      %572 = vmatprep.subr.mxu0 %v245
      %573 = vmatpush1.msra.mxu0 %v244
      %574 = vmatprep.subr.mxu0 %v249
      %575 = vmatpush1.msra.mxu0 %v248
      %576 = vmatprep.subr.mxu0 %v253
      %577 = vmatpush1.msra.mxu0 %v252
      %578 = vmatprep.subr.mxu0 %v257
      %579 = vmatpush1.msra.mxu0 %v256
      %580 = vmatprep.subr.mxu0 0.0
      %581 = vmatpush1.msra.mxu0 0.0
      %582 = vmatprep.subr.mxu0 0.0
      %583 = vmatpush1.msra.mxu0 0.0
      %584 = vmatprep.subr.mxu0 0.0
      %585 = vmatpush1.msra.mxu0 0.0
      %586 = vmatprep.subr.mxu0 0.0
      %587 = vmatpush1.msra.mxu0 0.0
      %588 = vmatprep.subr.mxu0 0.0
      %589 = vmatpush1.msra.mxu0 0.0
      %590 = vmatprep.subr.mxu0 0.0
      %591 = vmatpush1.msra.mxu0 0.0
      %592 = vmatprep.subr.mxu0 0.0
      %593 = vmatpush1.msra.mxu0 0.0
      %594 = vmatprep.subr.mxu0 0.0
      %595 = vmatpush1.msra.mxu0 0.0
      %596 = vmatprep.subr.mxu0 0.0
      %597 = vmatpush1.msra.mxu0 0.0
      %598 = vmatprep.subr.mxu0 0.0
      %599 = vmatpush1.msra.mxu0 0.0
      %600 = vmatprep.subr.mxu0 0.0
      %601 = vmatpush1.msra.mxu0 0.0
      %602 = vmatprep.subr.mxu0 0.0
      %603 = vmatpush1.msra.mxu0 0.0
      %604 = vmatprep.subr.mxu0 0.0
      %605 = vmatpush1.msra.mxu0 0.0
      %606 = vmatprep.subr.mxu0 0.0
      %607 = vmatpush1.msra.mxu0 0.0
      %608 = vmatprep.subr.mxu0 0.0
      %609 = vmatpush1.msra.mxu0 0.0
      %610 = vmatprep.subr.mxu0 0.0
      %611 = vmatpush1.msra.mxu0 0.0
      %612 = vmatprep.subr.mxu0 0.0
      %613 = vmatpush1.msra.mxu0 0.0
      %614 = vmatprep.subr.mxu0 0.0
      %615 = vmatpush1.msra.mxu0 0.0
      %616 = vmatprep.subr.mxu0 0.0
      %617 = vmatpush1.msra.mxu0 0.0
      %618 = vmatprep.subr.mxu0 0.0
      %619 = vmatpush1.msra.mxu0 0.0
      %620 = vmatprep.subr.mxu0 0.0
      %621 = vmatpush1.msra.mxu0 0.0
      %622 = vmatprep.subr.mxu0 0.0
      %623 = vmatpush1.msra.mxu0 0.0
      %624 = vmatprep.subr.mxu0 0.0
      %625 = vmatpush1.msra.mxu0 0.0
      %626 = vmatprep.subr.mxu0 0.0
      %627 = vmatpush1.msra.mxu0 0.0
      %628 = vmatprep.mubr.f32.mxu0 0.0
      %629 = vmatmul.mubr.f32.gmra.mrb[0].mxu0 %v356
      %v630 = vpop.f32.mrb[0].mxu0
      %v631 = vadd.f32 %v277, %v630
      %v632 = vpop.f32.mrb[0].mxu0
      %v633 = vadd.f32 %v277, %v632
      %634 = vmatprep.mubr.f32.mxu0 0.0
      %635 = vmatmul.mubr.f32.gmra.mrb[0].mxu0 %v359
      %v636 = vpop.f32.mrb[0].mxu0
      %v637 = vadd.f32 %v282, %v636
      %v638 = vpop.f32.mrb[0].mxu0
      %v639 = vadd.f32 %v282, %v638
      %640 = vmatprep.mubr.f32.mxu0 0.0
      %641 = vmatmul.mubr.f32.gmra.mrb[0].mxu0 %v362
      %v642 = vpop.f32.mrb[0].mxu0
      %v643 = vadd.f32 %v287, %v642
      %v644 = vpop.f32.mrb[0].mxu0
      %v645 = vadd.f32 %v287, %v644
      %646 = vmatprep.mubr.f32.mxu0 0.0
      %647 = vmatmul.mubr.f32.gmra.mrb[0].mxu0 %v365
      %v648 = vpop.f32.mrb[0].mxu0
      %v649 = vadd.f32 %v292, %v648
      %v650 = vpop.f32.mrb[0].mxu0
      %v651 = vadd.f32 %v292, %v650
      %652 = vmatprep.mubr.f32.mxu0 0.0
      %653 = vmatmul.mubr.f32.gmra.mrb[0].mxu0 %v368
      %v654 = vpop.f32.mrb[0].mxu0
      %v655 = vadd.f32 %v297, %v654
      %v656 = vpop.f32.mrb[0].mxu0
      %v657 = vadd.f32 %v297, %v656
      %658 = vmatprep.mubr.f32.mxu0 0.0
      %659 = vmatmul.mubr.f32.gmra.mrb[0].mxu0 %v371
      %v660 = vpop.f32.mrb[0].mxu0
      %v661 = vadd.f32 %v302, %v660
      %v662 = vpop.f32.mrb[0].mxu0
      %v663 = vadd.f32 %v302, %v662
      %664 = vmatprep.mubr.f32.mxu0 0.0
      %665 = vmatmul.mubr.f32.gmra.mrb[0].mxu0 %v374
      %v666 = vpop.f32.mrb[0].mxu0
      %v667 = vadd.f32 %v307, %v666
      %v668 = vpop.f32.mrb[0].mxu0
      %v669 = vadd.f32 %v307, %v668
      %670 = vmatprep.mubr.f32.mxu0 0.0
      %671 = vmatmul.mubr.f32.gmra.mrb[0].mxu0 %v377
      %v672 = vpop.f32.mrb[0].mxu0
      %v673 = vadd.f32 %v312, %v672
      %v674 = vpop.f32.mrb[0].mxu0
      %v675 = vadd.f32 %v312, %v674
      %676 = vmatprep.mubr.f32.mxu0 0.0
      %677 = vmatmul.mubr.f32.gmra.mrb[0].mxu0 %v380
      %v678 = vpop.f32.mrb[0].mxu0
      %v679 = vadd.f32 %v317, %v678
      %v680 = vpop.f32.mrb[0].mxu0
      %v681 = vadd.f32 %v317, %v680
      %682 = vmatprep.mubr.f32.mxu0 0.0
      %683 = vmatmul.mubr.f32.gmra.mrb[0].mxu0 %v383
      %v684 = vpop.f32.mrb[0].mxu0
      %v685 = vadd.f32 %v322, %v684
      %v686 = vpop.f32.mrb[0].mxu0
      %v687 = vadd.f32 %v322, %v686
      %688 = vmatprep.mubr.f32.mxu0 0.0
      %689 = vmatmul.mubr.f32.gmra.mrb[0].mxu0 %v386
      %v690 = vpop.f32.mrb[0].mxu0
      %v691 = vadd.f32 %v327, %v690
      %v692 = vpop.f32.mrb[0].mxu0
      %v693 = vadd.f32 %v327, %v692
      %694 = vmatprep.mubr.f32.mxu0 0.0
      %695 = vmatmul.mubr.f32.gmra.mrb[0].mxu0 %v389
      %v696 = vpop.f32.mrb[0].mxu0
      %v697 = vadd.f32 %v332, %v696
      %v698 = vpop.f32.mrb[0].mxu0
      %v699 = vadd.f32 %v332, %v698
      %700 = vmatprep.mubr.f32.mxu0 0.0
      %701 = vmatmul.mubr.f32.gmra.mrb[0].mxu0 %v392
      %v702 = vpop.f32.mrb[0].mxu0
      %v703 = vadd.f32 %v337, %v702
      %v704 = vpop.f32.mrb[0].mxu0
      %v705 = vadd.f32 %v337, %v704
      %706 = vmatprep.mubr.f32.mxu0 0.0
      %707 = vmatmul.mubr.f32.gmra.mrb[0].mxu0 %v395
      %v708 = vpop.f32.mrb[0].mxu0
      %v709 = vadd.f32 %v342, %v708
      %v710 = vpop.f32.mrb[0].mxu0
      %v711 = vadd.f32 %v342, %v710
      %712 = vmatprep.mubr.f32.mxu0 0.0
      %713 = vmatmul.mubr.f32.gmra.mrb[0].mxu0 %v398
      %v714 = vpop.f32.mrb[0].mxu0
      %v715 = vadd.f32 %v347, %v714
      %v716 = vpop.f32.mrb[0].mxu0
      %v717 = vadd.f32 %v347, %v716
      %718 = vmatprep.mubr.f32.mxu0 0.0
      %719 = vmatmul.mubr.f32.gmra.mrb[0].mxu0 %v401
      %v720 = vpop.f32.mrb[0].mxu0
      %v721 = vadd.f32 %v352, %v720
      %v722 = vpop.f32.mrb[0].mxu0
      %v723 = vadd.f32 %v352, %v722
      %724 = vdwg.mxu0
      %725 = vst [vmem:[%s208] sm:$0xff] %v470
      %726 = vst [vmem:[%s208 + $0x8] sm:$0xff] %v472
      %727 = vst [vmem:[%s208 + $0x10] sm:$0xff] %v631
      %728 = vst [vmem:[%s208 + $0x18] sm:$0xff] %v633
      %729 = vst [vmem:[%s208 + $0x20] sm:$0xff] %v476
      %730 = vst [vmem:[%s208 + $0x28] sm:$0xff] %v478
      %731 = vst [vmem:[%s208 + $0x30] sm:$0xff] %v637
      %732 = vst [vmem:[%s208 + $0x38] sm:$0xff] %v639
      %733 = vst [vmem:[%s208 + $0x40] sm:$0xff] %v482
      %734 = vst [vmem:[%s208 + $0x48] sm:$0xff] %v484
      %735 = vst [vmem:[%s208 + $0x50] sm:$0xff] %v643
      %736 = vst [vmem:[%s208 + $0x58] sm:$0xff] %v645
      %737 = vst [vmem:[%s208 + $0x60] sm:$0xff] %v488
      %738 = vst [vmem:[%s208 + $0x68] sm:$0xff] %v490
      %739 = vst [vmem:[%s208 + $0x70] sm:$0xff] %v649
      %740 = vst [vmem:[%s208 + $0x78] sm:$0xff] %v651
      %741 = vst [vmem:[%s208 + $0x80] sm:$0xff] %v494
      %742 = vst [vmem:[%s208 + $0x88] sm:$0xff] %v496
      %743 = vst [vmem:[%s208 + $0x90] sm:$0xff] %v655
      %744 = vst [vmem:[%s208 + $0x98] sm:$0xff] %v657
      %745 = vst [vmem:[%s208 + $0xa0] sm:$0xff] %v500
      %746 = vst [vmem:[%s208 + $0xa8] sm:$0xff] %v502
      %747 = vst [vmem:[%s208 + $0xb0] sm:$0xff] %v661
      %748 = vst [vmem:[%s208 + $0xb8] sm:$0xff] %v663
      %749 = vst [vmem:[%s208 + $0xc0] sm:$0xff] %v506
      %750 = vst [vmem:[%s208 + $0xc8] sm:$0xff] %v508
      %751 = vst [vmem:[%s208 + $0xd0] sm:$0xff] %v667
      %752 = vst [vmem:[%s208 + $0xd8] sm:$0xff] %v669
      %753 = vst [vmem:[%s208 + $0xe0] sm:$0xff] %v512
      %754 = vst [vmem:[%s208 + $0xe8] sm:$0xff] %v514
      %755 = vst [vmem:[%s208 + $0xf0] sm:$0xff] %v673
      %756 = vst [vmem:[%s208 + $0xf8] sm:$0xff] %v675
      %757 = vst [vmem:[%s208 + $0x100] sm:$0xff] %v518
      %758 = vst [vmem:[%s208 + $0x108] sm:$0xff] %v520
      %759 = vst [vmem:[%s208 + $0x110] sm:$0xff] %v679
      %760 = vst [vmem:[%s208 + $0x118] sm:$0xff] %v681
      %761 = vst [vmem:[%s208 + $0x120] sm:$0xff] %v524
      %762 = vst [vmem:[%s208 + $0x128] sm:$0xff] %v526
      %763 = vst [vmem:[%s208 + $0x130] sm:$0xff] %v685
      %764 = vst [vmem:[%s208 + $0x138] sm:$0xff] %v687
      %765 = vst [vmem:[%s208 + $0x140] sm:$0xff] %v530
      %766 = vst [vmem:[%s208 + $0x148] sm:$0xff] %v532
      %767 = vst [vmem:[%s208 + $0x150] sm:$0xff] %v691
      %768 = vst [vmem:[%s208 + $0x158] sm:$0xff] %v693
      %769 = vst [vmem:[%s208 + $0x160] sm:$0xff] %v536
      %770 = vst [vmem:[%s208 + $0x168] sm:$0xff] %v538
      %771 = vst [vmem:[%s208 + $0x170] sm:$0xff] %v697
      %772 = vst [vmem:[%s208 + $0x178] sm:$0xff] %v699
      %773 = vst [vmem:[%s208 + $0x180] sm:$0xff] %v542
      %774 = vst [vmem:[%s208 + $0x188] sm:$0xff] %v544
      %775 = vst [vmem:[%s208 + $0x190] sm:$0xff] %v703
      %776 = vst [vmem:[%s208 + $0x198] sm:$0xff] %v705
      %777 = vst [vmem:[%s208 + $0x1a0] sm:$0xff] %v548
      %778 = vst [vmem:[%s208 + $0x1a8] sm:$0xff] %v550
      %779 = vst [vmem:[%s208 + $0x1b0] sm:$0xff] %v709
      %780 = vst [vmem:[%s208 + $0x1b8] sm:$0xff] %v711
      %781 = vst [vmem:[%s208 + $0x1c0] sm:$0xff] %v554
      %782 = vst [vmem:[%s208 + $0x1c8] sm:$0xff] %v556
      %783 = vst [vmem:[%s208 + $0x1d0] sm:$0xff] %v715
      %784 = vst [vmem:[%s208 + $0x1d8] sm:$0xff] %v717
      %785 = vst [vmem:[%s208 + $0x1e0] sm:$0xff] %v560
      %786 = vst [vmem:[%s208 + $0x1e8] sm:$0xff] %v562
      %787 = vst [vmem:[%s208 + $0x1f0] sm:$0xff] %v721
      %788 = vst [vmem:[%s208 + $0x1f8] sm:$0xff] %v723
      %s789 = smul.u32 4, %s19
      %p790 = scmp.lt.s32.totalorder %s18, 1
      %s791 = scalar_select %p790, %s18, 1
      %p792 = scmp.lt.s32.totalorder %s789, 3
      %s793 = scalar_select %p792, %s789, 3
      %s794 = smul.addr %s791, 64
      %s795 = sadd.s32 %s793, %s794
      %s796 = smul.addr %s795, 8
      %s797 = scalar_lea.vmem %s3, %s796
      // Predicated region
      $region33: #{fwd.1} parent=31 // pred_check
        %p798 = pneg %p116
      $region34: #{fwd.1} parent=31 // pred_check_branch
        %800 = sbr.rel (%p798) target = $region36
      $region35: #{fwd.1} parent=31 // pred_region
        %s801 = smul.u32 4, %s19
      $region36: #{fwd.1} parent=31 // pred_fallthru
        _
    $region32: #{fwd.1} parent=5 // pred_fallthru
      _
    %p802 = scmp.le.s32.totalorder 2, %s9
    // Predicated region
    $region37: #{fwd.1} parent=5 // pred_check
      %p803 = pneg %p802
    $region38: #{fwd.1} parent=5 // pred_check_branch
      %805 = sbr.rel (%p803) target = $region40
    $region39: #{fwd.1} parent=5 // pred_region
      %s806 = ssub.s32 %s9, 2
      // Predicated region
      $region41: #{fwd.1} parent=39 // pred_check
        %p807 = pneg %p122
      $region42: #{fwd.1} parent=39 // pred_check_branch
        %809 = sbr.rel (%p807) target = $region44
      $region43: #{fwd.1} parent=39 // pred_region
        %s810 = smul.u32 4, %s21
        %p811 = scmp.lt.s32.totalorder %s20, 1
        %s812 = scalar_select %p811, %s20, 1
        %p813 = scmp.lt.s32.totalorder %s810, 3
        %s814 = scalar_select %p813, %s810, 3
        %s815 = smul.addr %s812, 64
        %s816 = sadd.s32 %s814, %s815
        %s817 = smul.addr %s816, 8
        %s818 = scalar_lea.vmem %s3, %s817
      $region44: #{fwd.1} parent=39 // pred_fallthru
        _
    $region40: #{fwd.1} parent=5 // pred_fallthru
      _
  $region6: #{fwd.1} parent=0 // loop_footer
    %s13 = sadd.s32 1, %s9
  $region7: #{fwd.1} parent=0 // loop_footer_branch
    %8 = sbr.rel target = $region3
  $region8: #{fwd.1} parent=0 // loop_exit
    _

</llo_original>
